<compile_context>
chip_gen: v7x
topology: tpu7x:2x2x1
jax: 0.10.0
libtpu: 0.0.40
codegen_flags: <defaults>
</compile_context>

<pallas_src>
import math
import functools

import jax
import jax.numpy as jnp
from jax.experimental import pallas as pl
from jax.experimental.pallas import tpu as pltpu


def _wscale_kernel(x_ref, o_ref, *, scale):
    x = x_ref[...]
    o_ref[...] = (x.astype(jnp.float32) * jnp.float32(scale)).astype(o_ref.dtype)


def wscale_forward(x, scale, *, lanes=1024, target_block_bytes=2 * 1024 * 1024,
                   donate_input=False):
    """Apply WScaleLayer: x * scale.  Works for any shape / float dtype."""
    orig_shape = x.shape
    dtype = x.dtype
    total = x.size
    itemsize = jnp.dtype(dtype).itemsize

    # ---- lane-dense 2-D view -------------------------------------------------
    # Big lane dim (multiple of 128) for unmasked vst; shrink for tiny inputs.
    lanes = int(lanes)
    if total < lanes:
        lanes = max(128, pl.cdiv(total, 128) * 128)
    rows = pl.cdiv(total, lanes)

    # ---- dtype-aware block rows targeting ~target_block_bytes per block -----
    sublane = max(8, 32 // itemsize)          # 8 f32, 16 bf16/f16, 32 int8/fp8
    target_rows = max(1, target_block_bytes // (lanes * itemsize))
    block_rows = max(sublane, (target_rows // sublane) * sublane)
    if block_rows >= rows:
        block_rows = rows                      # full-extent dim: always legal
        rows_padded = rows
    else:
        rows_padded = pl.cdiv(rows, block_rows) * block_rows

    padded_total = rows_padded * lanes
    flat = x.reshape(-1)
    if padded_total != total:
        flat = jnp.pad(flat, (0, padded_total - total))
    x2d = flat.reshape(rows_padded, lanes)

    grid = (rows_padded // block_rows,)
    kernel = functools.partial(_wscale_kernel, scale=float(scale))

    out2d = pl.pallas_call(
        kernel,
        out_shape=jax.ShapeDtypeStruct((rows_padded, lanes), dtype),
        grid_spec=pltpu.PrefetchScalarGridSpec(
            num_scalar_prefetch=0,
            grid=grid,
            in_specs=[pl.BlockSpec((block_rows, lanes), lambda i: (i, 0))],
            out_specs=pl.BlockSpec((block_rows, lanes), lambda i: (i, 0)),
        ),
        compiler_params=pltpu.CompilerParams(
            dimension_semantics=("parallel",),
            vmem_limit_bytes=32 * 1024 * 1024,
        ),
        input_output_aliases=({0: 0} if donate_input else {}),
    )(x2d)

    out_flat = out2d.reshape(-1)
    if padded_total != total:
        out_flat = out_flat[:total]
    return out_flat.reshape(orig_shape)


class WScale:
    """JAX mirror of the PyTorch WScaleLayer.

    `incoming_weight_shape` plays the role of `incoming.weight` in the PyTorch
    module: scale = sqrt(gain / numel(weight[0])).
    """

    def __init__(self, incoming_weight_shape, gain=2):
        self.gain = gain
        fan_in = 1
        for d in incoming_weight_shape[1:]:
            fan_in *= d
        self.scale = math.sqrt(self.gain / fan_in)

    def __call__(self, x):
        return wscale_forward(x, self.scale)

    def __repr__(self):
        return "{}(gain={})".format(self.__class__.__name__, self.gain)


if __name__ == "__main__":
    # "incoming" layer: Conv2d(4, 4, kernel_size=3) -> weight (4, 4, 3, 3),
    # so weight[0].numel() == 36 and scale = sqrt(2/36).  Only the shape
    # matters for the forward pass.
    incoming_weight_shape = (4, 4, 3, 3)
    layer = WScale(incoming_weight_shape, gain=2)

    key = jax.random.PRNGKey(0)
    x = jax.random.normal(key, (2, 4, 16, 16), dtype=jnp.float32)  # NCHW

    out = jax.block_until_ready(layer(x))

    # Reference check (plain JAX).
    ref = x * jnp.float32(layer.scale)
    assert out.shape == x.shape and out.dtype == x.dtype
    assert jnp.allclose(out, ref, atol=1e-6, rtol=1e-6)

    # Also exercise a shape whose row/lane counts are NOT clean multiples
    # (previous version asserted out on this).
    x2 = jax.random.normal(jax.random.PRNGKey(1), (3, 5, 7, 11), dtype=jnp.bfloat16)
    out2 = jax.block_until_ready(layer(x2))
    ref2 = (x2.astype(jnp.float32) * jnp.float32(layer.scale)).astype(jnp.bfloat16)
    assert out2.shape == x2.shape and out2.dtype == x2.dtype
    assert jnp.allclose(out2.astype(jnp.float32), ref2.astype(jnp.float32),
                        atol=1e-2, rtol=1e-2)

    print("KERNEL_OK")
</pallas_src>

<mosaic_0001>
module attributes {stable_mosaic.version = 11 : i64} {
  func.func @_wscale_kernel(%arg0: i32, %arg1: memref<2x1024xf32, #tpu.memory_space<vmem>>, %arg2: memref<2x1024xf32, #tpu.memory_space<vmem>>) attributes {dimension_semantics = [#tpu.dimension_semantics<parallel>], iteration_bounds = array<i64: 1>, scalar_prefetch = 0 : i64, scratch_operands = 0 : i64, tpu.core_type = #tpu.core_type<tc>, window_params = [{transform_indices = @transform_0, window_bounds = array<i64: 2, 1024>}, {transform_indices = @transform_1, window_bounds = array<i64: 2, 1024>}]} {
    %c0 = arith.constant 0 : index
    %c0_0 = arith.constant 0 : index
    %0 = vector.load %arg1[%c0, %c0_0] : memref<2x1024xf32, #tpu.memory_space<vmem>>, vector<2x1024xf32>
    %cst = arith.constant 0.235702261 : f32
    %1 = vector.broadcast %cst : f32 to vector<2x1024xf32>
    %2 = arith.mulf %0, %1 : vector<2x1024xf32>
    %c0_1 = arith.constant 0 : index
    %c0_2 = arith.constant 0 : index
    %3 = vector.load %arg2[%c0_1, %c0_2] : memref<2x1024xf32, #tpu.memory_space<vmem>>, vector<2x1024xf32>
    tpu.vector_store %arg2[%c0_1, %c0_2], %2 {strides = array<i32>} : memref<2x1024xf32, #tpu.memory_space<vmem>>, vector<2x1024xf32>,
    return
  }
  func.func @transform_0(%arg0: i32) -> (i32, i32) {
    %c0_i32 = arith.constant 0 : i32
    %c0_i32_0 = arith.constant 0 : i32
    return %arg0, %c0_i32 : i32, i32
  }
  func.func @transform_1(%arg0: i32) -> (i32, i32) {
    %c0_i32 = arith.constant 0 : i32
    %c0_i32_0 = arith.constant 0 : i32
    return %arg0, %c0_i32 : i32, i32
  }
}

</mosaic_0001>

<llo_original>
// kernel: tpu_custom_call.1
$region0: #{tpu_custom_call.1}
  #allocation0 [shape = 'u32[]', space=smem, size = 0x4, offset = 0x4, fixed_abs, tag = 'smem constant byte address 0x4 - core index']
  #allocation1 [shape = 'u32[144,128]{1,0:T(1,128)}', space=vmem, size = 0x12000, scoped, tag = 'internal scratch']
  %s0 = inlined_call_operand.hbm [shape: f32[2,1024], index: 0, kind: input, shape index: {}]
  %s1 = inlined_call_operand.hbm [shape: f32[2,1024], index: 1, kind: output, shape index: {}]
  %s2 = sld [smem:[#allocation0]]
  $region18: #{tpu_custom_call.1} parent=0
    _
  %s4 = ssub.s32 1, %s2
  %s5 = scalar_select 0, %s4, %s2
  $region1: #{tpu_custom_call.1} parent=0
    #allocation2 [shape = 'u8[8192]{0}', space=vmem, size = 0x2000, scoped, tag = 'input window, operand 0, single buffered']
    #allocation3 [shape = 's32[1]{0}', space=sflag, size = 0x4, scoped, tag = 'scoped memory for tpu_custom_call.1']
    #allocation4 [shape = 's32[1]{0}', space=sflag, size = 0x4, scoped, tag = 'scoped memory for tpu_custom_call.1']
    #allocation5 [shape = 'u8[8192]{0}', space=vmem, size = 0x2000, scoped, tag = 'output window, operand 0, single buffered']
    %6 = vsyncpa [#allocation3], 0
    %7 = vsyncpa [#allocation4], 0
    // Predicated region
    $region2: #{tpu_custom_call.1} parent=1 // pred_check
      _
    $region3: #{tpu_custom_call.1} parent=1 // pred_check_branch
      %9 = sbr.rel (0) target = $region5
    $region4: #{tpu_custom_call.1} parent=1 // pred_region
      %s11 = ssub.s32 256, 256
      %12 = vsyncadd [#allocation3], %s11
      %s14 = sshll.u32 [#allocation2], 4
      %s15 = int_to_ptr.vmem [resolvable:$true] %s14
      %17 = dma.hbm_to_vmem [thread:$0]  %s0, 256, %s15, [#allocation3]
    $region5: #{tpu_custom_call.1} parent=1 // pred_fallthru
      _
    // Predicated region
    $region6: #{tpu_custom_call.1} parent=1 // pred_check
      _
    $region7: #{tpu_custom_call.1} parent=1 // pred_check_branch
      %19 = sbr.rel (0) target = $region9
    $region8: #{tpu_custom_call.1} parent=1 // pred_region
      %20 = dma.done [#allocation3], 256
    $region9: #{tpu_custom_call.1} parent=1 // pred_fallthru
      _
    %v21 = vld [vmem:[#allocation2] sm:$0xff]
    %v22 = vld [vmem:[#allocation2 + $0x8] sm:$0xff]
    %v23 = vmul.f32 %v21, 0.23570226
    %v24 = vmul.f32 %v22, 0.23570226
    %25 = vst [vmem:[#allocation5] sm:$0xff] %v23
    %26 = vst [vmem:[#allocation5 + $0x8] sm:$0xff] %v24
    // Predicated region
    $region10: #{tpu_custom_call.1} parent=1 // pred_check
      _
    $region11: #{tpu_custom_call.1} parent=1 // pred_check_branch
      %28 = sbr.rel (0) target = $region13
    $region12: #{tpu_custom_call.1} parent=1 // pred_region
      %s30 = ssub.s32 256, 256
      %31 = vsyncadd [#allocation4], %s30
      %s33 = sshll.u32 [#allocation5], 4
      %s34 = int_to_ptr.vmem [resolvable:$true] %s33
      %36 = dma.vmem_to_hbm [thread:$0]  %s34, 256, %s1, [#allocation4]
    $region13: #{tpu_custom_call.1} parent=1 // pred_fallthru
      _
    // Predicated region
    $region14: #{tpu_custom_call.1} parent=1 // pred_check
      _
    $region15: #{tpu_custom_call.1} parent=1 // pred_check_branch
      %38 = sbr.rel (0) target = $region17
    $region16: #{tpu_custom_call.1} parent=1 // pred_region
      %39 = dma.done [#allocation4], 256
    $region17: #{tpu_custom_call.1} parent=1 // pred_fallthru
      _
    %40 = vsyncpa [#allocation3], 1
    %41 = vsyncpa [#allocation4], 1

</llo_original>
